<compile_context>
chip_gen: v7x
topology: tpu7x:2x2x1
jax: 0.10.0
libtpu: 0.0.40
codegen_flags: <defaults>
</compile_context>

<pallas_src>
import jax
import jax.numpy as jnp
from jax.experimental import pallas as pl
from jax.experimental.pallas import tpu as pltpu


def _leaky_relu(x, slope=0.2):
    return jnp.where(x > 0, x, slope * x)


def gcn_kernel(a_ref, x_ref, s_ref, invdeg_ref, w1_ref, w2_ref, w3_ref, o_ref):
    A = a_ref[...]          # (TB, N, N)      bf16
    X = x_ref[...]          # (TB, N, C_in)   f32
    s = s_ref[...]          # (TB, N, 1)      f32   rsqrt(num_neighbours + 1)
    inv_deg = invdeg_ref[...]  # (TB, N, 1)   f32   1 / num_neighbours
    W1 = w1_ref[...]        # (C_in,  C_hid)  f32   (pre-transposed)
    W2 = w2_ref[...]        # (C_hid, C_hid)  f32
    W3 = w3_ref[...]        # (C_hid, C_out)  f32

    ss = s * s              # (TB, N, 1)

    def a1_mul(z):
        # (A + I) @ z with A in bf16 (MXU-native, f32 accumulation); the
        # identity contribution is added in f32.
        return jnp.einsum('bij,bjc->bic', A, z.astype(jnp.bfloat16),
                          preferred_element_type=jnp.float32) + z

    # Layer 1:  H1 = lrelu((A_norm @ X) @ W1) = s * lrelu((A1 @ (s*X)) @ W1)
    # (the trailing s is deferred into the next layer's scale).
    Z = s * X
    P = _leaky_relu(jnp.einsum('bnk,kh->bnh', a1_mul(Z), W1,
                               preferred_element_type=jnp.float32))

    # Layer 2:  operand of the next propagate is s * H1 = (s*s) * P.
    Z = ss * P
    P = _leaky_relu(jnp.einsum('bnk,kh->bnh', a1_mul(Z), W2,
                               preferred_element_type=jnp.float32))

    # Degree scaling folded into the layer-3 propagate operand:
    #   s * (H2 / num_neighbours) = (s*s*inv_deg) * P.
    Z = (ss * inv_deg) * P

    # Layer 3 (no activation):  Out = (s * (A1 @ Z)) @ W3 = s * ((A1 @ Z) @ W3).
    out = s * jnp.einsum('bnk,ko->bno', a1_mul(Z), W3,
                         preferred_element_type=jnp.float32)
    o_ref[...] = out.astype(o_ref.dtype)


def _vmem_capacity_bytes():
    try:
        return int(pltpu.get_tpu_info().vmem_capacity_bytes)
    except Exception:
        return 64 * 1024 * 1024   # conservative (v7x per-TC)


def _vmem_estimate(tb, N, c_in, c_hidden, c_out):
    """Rough per-step working set (double-buffered I/O + weights + temps)."""
    f32, bf16 = 4, 2
    c_max = max(c_in, c_hidden, c_out)
    io = 2 * (bf16 * tb * N * N            # A block (bf16, double-buffered)
              + f32 * tb * N * c_in        # X block
              + f32 * tb * N * c_out       # output block
              + 2 * f32 * tb * N)          # s, inv_deg
    weights = 2 * f32 * (c_in * c_hidden + c_hidden * c_hidden + c_hidden * c_out)
    temps = bf16 * tb * N * c_max + 6 * f32 * tb * N * c_max
    return io + weights + temps


def _pick_tb(B, N, c_in, c_hidden, c_out):
    budget = _vmem_capacity_bytes() // 2
    for tb in range(B, 0, -1):
        if B % tb == 0 and _vmem_estimate(tb, N, c_in, c_hidden, c_out) <= budget:
            return tb
    return 1


def _vmem_limit_bytes(tb, N, c_in, c_hidden, c_out):
    cap = _vmem_capacity_bytes()
    hard_cap = int(0.75 * cap)
    est = int(1.5 * _vmem_estimate(tb, N, c_in, c_hidden, c_out))   # headroom
    floor = min(16 * 1024 * 1024, hard_cap)
    return max(min(est, hard_cap), floor)


def gcn_naive_pallas(X, A, W1, W2, W3):
    B, N, c_in = X.shape
    c_hidden = W1.shape[0]
    c_out = W3.shape[0]

    # Wrapper-side precompute (cheap, on the ORIGINAL f32 A, matching PyTorch):
    num_neighbours = jnp.sum(A, axis=-1, keepdims=True)          # (B, N, 1)
    s = jax.lax.rsqrt(num_neighbours + 1.0)                      # (B, N, 1)
    inv_deg = 1.0 / num_neighbours                               # (B, N, 1)
    A_bf = A.astype(jnp.bfloat16)                                # halve A's HBM bytes

    # Pre-transpose PyTorch-convention (out, in) weights once, outside the kernel.
    W1t = W1.T                       # (c_in,     c_hidden)
    W2t = W2.T                       # (c_hidden, c_hidden)
    W3t = W3.T                       # (c_hidden, c_out)

    TB = _pick_tb(B, N, c_in, c_hidden, c_out)

    return pl.pallas_call(
        gcn_kernel,
        out_shape=jax.ShapeDtypeStruct((B, N, c_out), X.dtype),
        grid=(B // TB,),
        in_specs=[
            pl.BlockSpec((TB, N, N), lambda b: (b, 0, 0)),
            pl.BlockSpec((TB, N, c_in), lambda b: (b, 0, 0)),
            pl.BlockSpec((TB, N, 1), lambda b: (b, 0, 0)),
            pl.BlockSpec((TB, N, 1), lambda b: (b, 0, 0)),
            pl.BlockSpec((c_in, c_hidden), lambda b: (0, 0)),
            pl.BlockSpec((c_hidden, c_hidden), lambda b: (0, 0)),
            pl.BlockSpec((c_hidden, c_out), lambda b: (0, 0)),
        ],
        out_specs=pl.BlockSpec((TB, N, c_out), lambda b: (b, 0, 0)),
        compiler_params=pltpu.CompilerParams(
            dimension_semantics=("parallel",),
            vmem_limit_bytes=_vmem_limit_bytes(TB, N, c_in, c_hidden, c_out)),
    )(A_bf, X, s, inv_deg, W1t, W2t, W3t)


def gcn_naive_ref(X, A, W1, W2, W3):
    """Pure-JAX f32 reference mirroring the PyTorch module exactly."""
    num_neighbours = A.sum(axis=-1, keepdims=True)
    N = A.shape[1]
    A1 = A + jnp.eye(N, dtype=A.dtype)
    d = A1.sum(axis=2)
    D = jnp.einsum('bi,ij->bij', d ** -0.5, jnp.eye(N, dtype=A.dtype))
    An = D @ A1 @ D
    lrelu = lambda x: jnp.where(x > 0, x, 0.2 * x)
    H = lrelu((An @ X) @ W1.T)
    H = lrelu((An @ H) @ W2.T)
    H = H / num_neighbours
    return (An @ H) @ W3.T


if __name__ == "__main__":
    B, N = 2, 8
    c_in, c_hidden, c_out = 4, 32, 4

    key = jax.random.PRNGKey(0)
    kx, ka, k1, k2, k3 = jax.random.split(key, 5)

    # Positive adjacency so d^-0.5 and /num_neighbours are well-defined.
    X = jax.random.normal(kx, (B, N, c_in), dtype=jnp.float32)
    A = jax.random.uniform(ka, (B, N, N), dtype=jnp.float32, minval=0.1, maxval=1.0)

    # Deterministic weights, PyTorch Linear-style uniform init (bias=False).
    def linear_init(k, out_f, in_f):
        bound = 1.0 / jnp.sqrt(in_f)
        return jax.random.uniform(k, (out_f, in_f), jnp.float32, -bound, bound)

    W1 = linear_init(k1, c_hidden, c_in)
    W2 = linear_init(k2, c_hidden, c_hidden)
    W3 = linear_init(k3, c_out, c_hidden)

    out = gcn_naive_pallas(X, A, W1, W2, W3)
    out = jax.block_until_ready(out)

    ref = gcn_naive_ref(X, A, W1, W2, W3)
    assert out.shape == (B, N, c_out)
    # bf16 adjacency / propagate operands (f32 accumulation, identity added in
    # f32) => looser tolerance than the pure-f32 reference.
    assert jnp.allclose(out, ref, atol=5e-2, rtol=5e-2), "mismatch vs reference"

    print("KERNEL_OK")
</pallas_src>

<mosaic_0001>
module attributes {stable_mosaic.version = 11 : i64} {
  func.func @gcn_kernel(%arg0: i32, %arg1: memref<2x8x8xbf16, #tpu.memory_space<vmem>>, %arg2: memref<2x8x4xf32, #tpu.memory_space<vmem>>, %arg3: memref<2x8x1xf32, #tpu.memory_space<vmem>>, %arg4: memref<2x8x1xf32, #tpu.memory_space<vmem>>, %arg5: memref<4x32xf32, #tpu.memory_space<vmem>>, %arg6: memref<32x32xf32, #tpu.memory_space<vmem>>, %arg7: memref<32x4xf32, #tpu.memory_space<vmem>>, %arg8: memref<2x8x4xf32, #tpu.memory_space<vmem>>) attributes {dimension_semantics = [#tpu.dimension_semantics<parallel>], iteration_bounds = array<i64: 1>, scalar_prefetch = 0 : i64, scratch_operands = 0 : i64, tpu.core_type = #tpu.core_type<tc>, window_params = [{transform_indices = @transform_0, window_bounds = array<i64: 2, 8, 8>}, {transform_indices = @transform_1, window_bounds = array<i64: 2, 8, 4>}, {transform_indices = @transform_2, window_bounds = array<i64: 2, 8, 1>}, {transform_indices = @transform_3, window_bounds = array<i64: 2, 8, 1>}, {pipeline_mode = #tpu.pipeline_mode<synchronous>, transform_indices = @transform_4, window_bounds = array<i64: 4, 32>}, {pipeline_mode = #tpu.pipeline_mode<synchronous>, transform_indices = @transform_5, window_bounds = array<i64: 32, 32>}, {pipeline_mode = #tpu.pipeline_mode<synchronous>, transform_indices = @transform_6, window_bounds = array<i64: 32, 4>}, {transform_indices = @transform_7, window_bounds = array<i64: 2, 8, 4>}]} {
    %c0 = arith.constant 0 : index
    %c0_0 = arith.constant 0 : index
    %c0_1 = arith.constant 0 : index
    %0 = vector.load %arg1[%c0, %c0_0, %c0_1] : memref<2x8x8xbf16, #tpu.memory_space<vmem>>, vector<2x8x8xbf16>
    %c0_2 = arith.constant 0 : index
    %c0_3 = arith.constant 0 : index
    %c0_4 = arith.constant 0 : index
    %1 = vector.load %arg2[%c0_2, %c0_3, %c0_4] : memref<2x8x4xf32, #tpu.memory_space<vmem>>, vector<2x8x4xf32>
    %c0_5 = arith.constant 0 : index
    %c0_6 = arith.constant 0 : index
    %c0_7 = arith.constant 0 : index
    %2 = vector.load %arg3[%c0_5, %c0_6, %c0_7] : memref<2x8x1xf32, #tpu.memory_space<vmem>>, vector<2x8x1xf32>
    %c0_8 = arith.constant 0 : index
    %c0_9 = arith.constant 0 : index
    %c0_10 = arith.constant 0 : index
    %3 = vector.load %arg4[%c0_8, %c0_9, %c0_10] : memref<2x8x1xf32, #tpu.memory_space<vmem>>, vector<2x8x1xf32>
    %c0_11 = arith.constant 0 : index
    %c0_12 = arith.constant 0 : index
    %4 = vector.load %arg5[%c0_11, %c0_12] : memref<4x32xf32, #tpu.memory_space<vmem>>, vector<4x32xf32>
    %c0_13 = arith.constant 0 : index
    %c0_14 = arith.constant 0 : index
    %5 = vector.load %arg6[%c0_13, %c0_14] : memref<32x32xf32, #tpu.memory_space<vmem>>, vector<32x32xf32>
    %c0_15 = arith.constant 0 : index
    %c0_16 = arith.constant 0 : index
    %6 = vector.load %arg7[%c0_15, %c0_16] : memref<32x4xf32, #tpu.memory_space<vmem>>, vector<32x4xf32>
    %7 = arith.mulf %2, %2 : vector<2x8x1xf32>
    %8 = vector.broadcast %2 : vector<2x8x1xf32> to vector<2x8x4xf32>
    %9 = arith.mulf %8, %1 : vector<2x8x4xf32>
    %10 = arith.truncf %9 : vector<2x8x4xf32> to vector<2x8x4xbf16>
    "tpu.trace_start"() <{level = 10 : i32, message = "bij,bjc->bic"}> : () -> ()
    %cst = arith.constant dense<0.000000e+00> : vector<2x8x4xf32>
    %11 = tpu.matmul %0, %10, %cst {dimension_numbers = #tpu.dot_dimension_numbers<[2], [1], [1], [2], [0, 0, 0, 1, 1, 2], [0], [0]>} : vector<2x8x8xbf16>, vector<2x8x4xbf16>, vector<2x8x4xf32> -> vector<2x8x4xf32>
    "tpu.trace_stop"() : () -> ()
    %12 = arith.addf %11, %9 : vector<2x8x4xf32>
    "tpu.trace_start"() <{level = 10 : i32, message = "bnk,kh->bnh"}> : () -> ()
    %cst_17 = arith.constant dense<0.000000e+00> : vector<2x8x32xf32>
    %13 = tpu.matmul %12, %4, %cst_17 {dimension_numbers = #tpu.dot_dimension_numbers<[2], [0], [0, 1], [1], [0, 0, 0, 1, 1, 1], [], []>} : vector<2x8x4xf32>, vector<4x32xf32>, vector<2x8x32xf32> -> vector<2x8x32xf32>
    %cst_18 = arith.constant 0.000000e+00 : f32
    "tpu.trace_stop"() : () -> ()
    %14 = vector.broadcast %cst_18 : f32 to vector<2x8x32xf32>
    %15 = arith.cmpf ogt, %13, %14 : vector<2x8x32xf32>
    %cst_19 = arith.constant 2.000000e-01 : f32
    %16 = vector.broadcast %cst_19 : f32 to vector<2x8x32xf32>
    %17 = arith.mulf %16, %13 : vector<2x8x32xf32>
    %18 = arith.select %15, %13, %17 : vector<2x8x32xi1>, vector<2x8x32xf32>
    %19 = vector.broadcast %7 : vector<2x8x1xf32> to vector<2x8x32xf32>
    %20 = arith.mulf %19, %18 : vector<2x8x32xf32>
    %21 = arith.truncf %20 : vector<2x8x32xf32> to vector<2x8x32xbf16>
    "tpu.trace_start"() <{level = 10 : i32, message = "bij,bjc->bic"}> : () -> ()
    %cst_20 = arith.constant dense<0.000000e+00> : vector<2x8x32xf32>
    %22 = tpu.matmul %0, %21, %cst_20 {dimension_numbers = #tpu.dot_dimension_numbers<[2], [1], [1], [2], [0, 0, 0, 1, 1, 2], [0], [0]>} : vector<2x8x8xbf16>, vector<2x8x32xbf16>, vector<2x8x32xf32> -> vector<2x8x32xf32>
    "tpu.trace_stop"() : () -> ()
    %23 = arith.addf %22, %20 : vector<2x8x32xf32>
    "tpu.trace_start"() <{level = 10 : i32, message = "bnk,kh->bnh"}> : () -> ()
    %cst_21 = arith.constant dense<0.000000e+00> : vector<2x8x32xf32>
    %24 = tpu.matmul %23, %5, %cst_21 {dimension_numbers = #tpu.dot_dimension_numbers<[2], [0], [0, 1], [1], [0, 0, 0, 1, 1, 1], [], []>} : vector<2x8x32xf32>, vector<32x32xf32>, vector<2x8x32xf32> -> vector<2x8x32xf32>
    %cst_22 = arith.constant 0.000000e+00 : f32
    "tpu.trace_stop"() : () -> ()
    %25 = vector.broadcast %cst_22 : f32 to vector<2x8x32xf32>
    %26 = arith.cmpf ogt, %24, %25 : vector<2x8x32xf32>
    %cst_23 = arith.constant 2.000000e-01 : f32
    %27 = vector.broadcast %cst_23 : f32 to vector<2x8x32xf32>
    %28 = arith.mulf %27, %24 : vector<2x8x32xf32>
    %29 = arith.select %26, %24, %28 : vector<2x8x32xi1>, vector<2x8x32xf32>
    %30 = arith.mulf %7, %3 : vector<2x8x1xf32>
    %31 = vector.broadcast %30 : vector<2x8x1xf32> to vector<2x8x32xf32>
    %32 = arith.mulf %31, %29 : vector<2x8x32xf32>
    %33 = arith.truncf %32 : vector<2x8x32xf32> to vector<2x8x32xbf16>
    "tpu.trace_start"() <{level = 10 : i32, message = "bij,bjc->bic"}> : () -> ()
    %cst_24 = arith.constant dense<0.000000e+00> : vector<2x8x32xf32>
    %34 = tpu.matmul %0, %33, %cst_24 {dimension_numbers = #tpu.dot_dimension_numbers<[2], [1], [1], [2], [0, 0, 0, 1, 1, 2], [0], [0]>} : vector<2x8x8xbf16>, vector<2x8x32xbf16>, vector<2x8x32xf32> -> vector<2x8x32xf32>
    "tpu.trace_stop"() : () -> ()
    %35 = arith.addf %34, %32 : vector<2x8x32xf32>
    "tpu.trace_start"() <{level = 10 : i32, message = "bnk,ko->bno"}> : () -> ()
    %cst_25 = arith.constant dense<0.000000e+00> : vector<2x8x4xf32>
    %36 = tpu.matmul %35, %6, %cst_25 {dimension_numbers = #tpu.dot_dimension_numbers<[2], [0], [0, 1], [1], [0, 0, 0, 1, 1, 1], [], []>} : vector<2x8x32xf32>, vector<32x4xf32>, vector<2x8x4xf32> -> vector<2x8x4xf32>
    "tpu.trace_stop"() : () -> ()
    %37 = vector.broadcast %2 : vector<2x8x1xf32> to vector<2x8x4xf32>
    %38 = arith.mulf %37, %36 : vector<2x8x4xf32>
    %c0_26 = arith.constant 0 : index
    %c0_27 = arith.constant 0 : index
    %c0_28 = arith.constant 0 : index
    %39 = vector.load %arg8[%c0_26, %c0_27, %c0_28] : memref<2x8x4xf32, #tpu.memory_space<vmem>>, vector<2x8x4xf32>
    tpu.vector_store %arg8[%c0_26, %c0_27, %c0_28], %38 {strides = array<i32>} : memref<2x8x4xf32, #tpu.memory_space<vmem>>, vector<2x8x4xf32>,
    return
  }
  func.func @transform_0(%arg0: i32) -> (i32, i32, i32) {
    %c0_i32 = arith.constant 0 : i32
    %c0_i32_0 = arith.constant 0 : i32
    %c0_i32_1 = arith.constant 0 : i32
    return %arg0, %c0_i32, %c0_i32_0 : i32, i32, i32
  }
  func.func @transform_1(%arg0: i32) -> (i32, i32, i32) {
    %c0_i32 = arith.constant 0 : i32
    %c0_i32_0 = arith.constant 0 : i32
    %c0_i32_1 = arith.constant 0 : i32
    return %arg0, %c0_i32, %c0_i32_0 : i32, i32, i32
  }
  func.func @transform_2(%arg0: i32) -> (i32, i32, i32) {
    %c0_i32 = arith.constant 0 : i32
    %c0_i32_0 = arith.constant 0 : i32
    %c0_i32_1 = arith.constant 0 : i32
    return %arg0, %c0_i32, %c0_i32_0 : i32, i32, i32
  }
  func.func @transform_3(%arg0: i32) -> (i32, i32, i32) {
    %c0_i32 = arith.constant 0 : i32
    %c0_i32_0 = arith.constant 0 : i32
    %c0_i32_1 = arith.constant 0 : i32
    return %arg0, %c0_i32, %c0_i32_0 : i32, i32, i32
  }
  func.func @transform_4(%arg0: i32) -> (i32, i32) {
    %c0_i32 = arith.constant 0 : i32
    %c0_i32_0 = arith.constant 0 : i32
    %c0_i32_1 = arith.constant 0 : i32
    return %c0_i32, %c0_i32_0 : i32, i32
  }
  func.func @transform_5(%arg0: i32) -> (i32, i32) {
    %c0_i32 = arith.constant 0 : i32
    %c0_i32_0 = arith.constant 0 : i32
    %c0_i32_1 = arith.constant 0 : i32
    return %c0_i32, %c0_i32_0 : i32, i32
  }
  func.func @transform_6(%arg0: i32) -> (i32, i32) {
    %c0_i32 = arith.constant 0 : i32
    %c0_i32_0 = arith.constant 0 : i32
    %c0_i32_1 = arith.constant 0 : i32
    return %c0_i32, %c0_i32_0 : i32, i32
  }
  func.func @transform_7(%arg0: i32) -> (i32, i32, i32) {
    %c0_i32 = arith.constant 0 : i32
    %c0_i32_0 = arith.constant 0 : i32
    %c0_i32_1 = arith.constant 0 : i32
    return %arg0, %c0_i32, %c0_i32_0 : i32, i32, i32
  }
}

</mosaic_0001>

<llo_original>
// kernel: tpu_custom_call.1
$region0: #{tpu_custom_call.1}
  #allocation0 [shape = 'u32[]', space=smem, size = 0x4, offset = 0x4, fixed_abs, tag = 'smem constant byte address 0x4 - core index']
  #allocation1 [shape = 'u32[144,128]{1,0:T(1,128)}', space=vmem, size = 0x12000, scoped, tag = 'internal scratch']
  %s0 = inlined_call_operand.vmem [shape: bf16[2,8,8], index: 0, kind: input, shape index: {}]
  %s1 = inlined_call_operand.vmem [shape: f32[2,8,4], index: 1, kind: input, shape index: {}]
  %s2 = inlined_call_operand.vmem [shape: f32[2,8,1], index: 2, kind: input, shape index: {}]
  %s3 = inlined_call_operand.vmem [shape: f32[2,8,1], index: 3, kind: input, shape index: {}]
  %s4 = inlined_call_operand.vmem [shape: f32[4,32], index: 4, kind: input, shape index: {}]
  %s5 = inlined_call_operand.vmem [shape: f32[32,32], index: 5, kind: input, shape index: {}]
  %s6 = inlined_call_operand.vmem [shape: f32[32,4], index: 6, kind: input, shape index: {}]
  %s7 = inlined_call_operand.vmem [shape: f32[2,8,4], index: 7, kind: output, shape index: {}]
  %s8 = sld [smem:[#allocation0]]
  $region38: #{tpu_custom_call.1} parent=0
    _
  %s10 = ssub.s32 1, %s8
  %s11 = scalar_select 0, %s10, %s8
  // Predicated region
  $region2: #{tpu_custom_call.1} parent=0 // pred_check
    _
  $region3: #{tpu_custom_call.1} parent=0 // pred_check_branch
    %13 = sbr.rel (0) target = $region5
  $region4: #{tpu_custom_call.1} parent=0 // pred_region
    _
  $region5: #{tpu_custom_call.1} parent=0 // pred_fallthru
    _
  // Predicated region
  $region6: #{tpu_custom_call.1} parent=0 // pred_check
    _
  $region7: #{tpu_custom_call.1} parent=0 // pred_check_branch
    %15 = sbr.rel (0) target = $region9
  $region8: #{tpu_custom_call.1} parent=0 // pred_region
    _
  $region9: #{tpu_custom_call.1} parent=0 // pred_fallthru
    _
  // Predicated region
  $region10: #{tpu_custom_call.1} parent=0 // pred_check
    _
  $region11: #{tpu_custom_call.1} parent=0 // pred_check_branch
    %17 = sbr.rel (0) target = $region13
  $region12: #{tpu_custom_call.1} parent=0 // pred_region
    _
  $region13: #{tpu_custom_call.1} parent=0 // pred_fallthru
    _
  // Predicated region
  $region14: #{tpu_custom_call.1} parent=0 // pred_check
    _
  $region15: #{tpu_custom_call.1} parent=0 // pred_check_branch
    %19 = sbr.rel (0) target = $region17
  $region16: #{tpu_custom_call.1} parent=0 // pred_region
    _
  $region17: #{tpu_custom_call.1} parent=0 // pred_fallthru
    _
  // Predicated region
  $region18: #{tpu_custom_call.1} parent=0 // pred_check
    _
  $region19: #{tpu_custom_call.1} parent=0 // pred_check_branch
    %21 = sbr.rel (0) target = $region21
  $region20: #{tpu_custom_call.1} parent=0 // pred_region
    _
  $region21: #{tpu_custom_call.1} parent=0 // pred_fallthru
    _
  // Predicated region
  $region22: #{tpu_custom_call.1} parent=0 // pred_check
    _
  $region23: #{tpu_custom_call.1} parent=0 // pred_check_branch
    %23 = sbr.rel (0) target = $region25
  $region24: #{tpu_custom_call.1} parent=0 // pred_region
    _
  $region25: #{tpu_custom_call.1} parent=0 // pred_fallthru
    _
  // Predicated region
  $region26: #{tpu_custom_call.1} parent=0 // pred_check
    _
  $region27: #{tpu_custom_call.1} parent=0 // pred_check_branch
    %25 = sbr.rel (0) target = $region29
  $region28: #{tpu_custom_call.1} parent=0 // pred_region
    _
  $region29: #{tpu_custom_call.1} parent=0 // pred_fallthru
    _
  %v27 = vld [vmem:[%s0] sm:$0xf]
  %v28 = vld [vmem:[%s0 + $0x4] sm:$0xf]
  %v29 = vld [vmem:[%s1] sm:$0xff]
  %v30 = vld [vmem:[%s1 + $0x8] sm:$0xff]
  %v31 = vld [vmem:[%s2] sm:$0xff]
  %v32 = vld [vmem:[%s2 + $0x8] sm:$0xff]
  %v33 = vld [vmem:[%s3] sm:$0xff]
  %v34 = vld [vmem:[%s3 + $0x8] sm:$0xff]
  %v35 = vld [vmem:[%s4] sm:$0xf]
  %v36 = vld [vmem:[%s5] sm:$0xff]
  %v37 = vld [vmem:[%s5 + $0x8] sm:$0xff]
  %v38 = vld [vmem:[%s5 + $0x10] sm:$0xff]
  %v39 = vld [vmem:[%s5 + $0x18] sm:$0xff]
  %v40 = vld [vmem:[%s6] sm:$0xff]
  %v41 = vld [vmem:[%s6 + $0x8] sm:$0xff]
  %v42 = vld [vmem:[%s6 + $0x10] sm:$0xff]
  %v43 = vld [vmem:[%s6 + $0x18] sm:$0xff]
  %v44 = vmul.f32 %v31, %v31
  %v45 = vmul.f32 %v32, %v32
  %47 = vset.pattern.permute.xlu0 0
  %48 = vperm.xlu0 %47, %v31
  %v49 = vpop.permute.xlu0 %48
  %52 = vset.pattern.permute.xlu0 0
  %53 = vperm.xlu0 %52, %v32
  %v54 = vpop.permute.xlu0 %53
  %v56 = vmul.f32 %v49, %v29
  %v57 = vmul.f32 %v54, %v30
  %v58 = vpack.c.bf16 %v56, %v56
  %v59 = vpack.c.bf16 %v57, %v57
  %vm60 = vcmask 64512
  %v62 = vsel %vm60, %v27, 0
  %vm64 = vcmask 1043456
  %v66 = vsel %vm64, %v58, 0
  %68 = vmatprep.subr.bf16.mxu0 0
  %69 = vmatpush1.bf16.msra.mxu0 %v66
  %70 = vmatprep.subr.bf16.mxu0 0
  %71 = vmatpush1.bf16.msra.mxu0 0
  %72 = vmatprep.subr.bf16.mxu0 0
  %73 = vmatpush1.bf16.msra.mxu0 0
  %74 = vmatprep.subr.bf16.mxu0 0
  %75 = vmatpush1.bf16.msra.mxu0 0
  %76 = vmatprep.subr.bf16.mxu0 0
  %77 = vmatpush1.bf16.msra.mxu0 0
  %78 = vmatprep.subr.bf16.mxu0 0
  %79 = vmatpush1.bf16.msra.mxu0 0
  %80 = vmatprep.subr.bf16.mxu0 0
  %81 = vmatpush1.bf16.msra.mxu0 0
  %82 = vmatprep.subr.bf16.mxu0 0
  %83 = vmatpush1.bf16.msra.mxu0 0
  %84 = vmatprep.subr.bf16.mxu0 0
  %85 = vmatpush1.bf16.msra.mxu0 0
  %86 = vmatprep.subr.bf16.mxu0 0
  %87 = vmatpush1.bf16.msra.mxu0 0
  %88 = vmatprep.subr.bf16.mxu0 0
  %89 = vmatpush1.bf16.msra.mxu0 0
  %90 = vmatprep.subr.bf16.mxu0 0
  %91 = vmatpush1.bf16.msra.mxu0 0
  %92 = vmatprep.subr.bf16.mxu0 0
  %93 = vmatpush1.bf16.msra.mxu0 0
  %94 = vmatprep.subr.bf16.mxu0 0
  %95 = vmatpush1.bf16.msra.mxu0 0
  %96 = vmatprep.subr.bf16.mxu0 0
  %97 = vmatpush1.bf16.msra.mxu0 0
  %98 = vmatprep.subr.bf16.mxu0 0
  %99 = vmatpush1.bf16.msra.mxu0 0
  %100 = vmatprep.mubr.bf16.mxu0 0
  %101 = vmatmul.mubr.bf16.gmra.mrb[0].mxu0 %v62
  %v102 = vpop.f32.mrb[0].mxu0
  %v103 = vadd.f32 %v56, %v102
  %v104 = vpop.f32.mrb[0].mxu0
  %v105 = vpop.f32.mrb[0].mxu0
  %v106 = vpop.f32.mrb[0].mxu0
  %107 = vdwg.mxu0
  %v109 = vsel %vm60, %v28, 0
  %v112 = vsel %vm64, %v59, 0
  %114 = vmatprep.subr.bf16.mxu0 0
  %115 = vmatpush1.bf16.msra.mxu0 %v112
  %116 = vmatprep.subr.bf16.mxu0 0
  %117 = vmatpush1.bf16.msra.mxu0 0
  %118 = vmatprep.subr.bf16.mxu0 0
  %119 = vmatpush1.bf16.msra.mxu0 0
  %120 = vmatprep.subr.bf16.mxu0 0
  %121 = vmatpush1.bf16.msra.mxu0 0
  %122 = vmatprep.subr.bf16.mxu0 0
  %123 = vmatpush1.bf16.msra.mxu0 0
  %124 = vmatprep.subr.bf16.mxu0 0
  %125 = vmatpush1.bf16.msra.mxu0 0
  %126 = vmatprep.subr.bf16.mxu0 0
  %127 = vmatpush1.bf16.msra.mxu0 0
  %128 = vmatprep.subr.bf16.mxu0 0
  %129 = vmatpush1.bf16.msra.mxu0 0
  %130 = vmatprep.subr.bf16.mxu0 0
  %131 = vmatpush1.bf16.msra.mxu0 0
  %132 = vmatprep.subr.bf16.mxu0 0
  %133 = vmatpush1.bf16.msra.mxu0 0
  %134 = vmatprep.subr.bf16.mxu0 0
  %135 = vmatpush1.bf16.msra.mxu0 0
  %136 = vmatprep.subr.bf16.mxu0 0
  %137 = vmatpush1.bf16.msra.mxu0 0
  %138 = vmatprep.subr.bf16.mxu0 0
  %139 = vmatpush1.bf16.msra.mxu0 0
  %140 = vmatprep.subr.bf16.mxu0 0
  %141 = vmatpush1.bf16.msra.mxu0 0
  %142 = vmatprep.subr.bf16.mxu0 0
  %143 = vmatpush1.bf16.msra.mxu0 0
  %144 = vmatprep.subr.bf16.mxu0 0
  %145 = vmatpush1.bf16.msra.mxu0 0
  %146 = vmatprep.mubr.bf16.mxu0 0
  %147 = vmatmul.mubr.bf16.gmra.mrb[0].mxu0 %v109
  %v148 = vpop.f32.mrb[0].mxu0
  %v149 = vadd.f32 %v57, %v148
  %v150 = vpop.f32.mrb[0].mxu0
  %v151 = vpop.f32.mrb[0].mxu0
  %v152 = vpop.f32.mrb[0].mxu0
  %153 = vdwg.mxu0
  %vm154 = vcmask 31744
  %v156 = vsel %vm154, %v103, 0
  %v159 = vsel %vm154, %v149, 0
  %v162 = vsel %vm64, %v35, 0
  %164 = vmatprep.subr.mxu0 0.0
  %165 = vmatpush1.msra.mxu0 %v162
  %166 = vmatprep.subr.mxu0 0.0
  %167 = vmatpush1.msra.mxu0 0.0
  %168 = vmatprep.subr.mxu0 0.0
  %169 = vmatpush1.msra.mxu0 0.0
  %170 = vmatprep.subr.mxu0 0.0
  %171 = vmatpush1.msra.mxu0 0.0
  %172 = vmatprep.subr.mxu0 0.0
  %173 = vmatpush1.msra.mxu0 0.0
  %174 = vmatprep.subr.mxu0 0.0
  %175 = vmatpush1.msra.mxu0 0.0
  %176 = vmatprep.subr.mxu0 0.0
  %177 = vmatpush1.msra.mxu0 0.0
  %178 = vmatprep.subr.mxu0 0.0
  %179 = vmatpush1.msra.mxu0 0.0
  %180 = vmatprep.subr.mxu0 0.0
  %181 = vmatpush1.msra.mxu0 0.0
  %182 = vmatprep.subr.mxu0 0.0
  %183 = vmatpush1.msra.mxu0 0.0
  %184 = vmatprep.subr.mxu0 0.0
  %185 = vmatpush1.msra.mxu0 0.0
  %186 = vmatprep.subr.mxu0 0.0
  %187 = vmatpush1.msra.mxu0 0.0
  %188 = vmatprep.subr.mxu0 0.0
  %189 = vmatpush1.msra.mxu0 0.0
  %190 = vmatprep.subr.mxu0 0.0
  %191 = vmatpush1.msra.mxu0 0.0
  %192 = vmatprep.subr.mxu0 0.0
  %193 = vmatpush1.msra.mxu0 0.0
  %194 = vmatprep.subr.mxu0 0.0
  %195 = vmatpush1.msra.mxu0 0.0
  %196 = vmatprep.subr.mxu0 0.0
  %197 = vmatpush1.msra.mxu0 0.0
  %198 = vmatprep.subr.mxu0 0.0
  %199 = vmatpush1.msra.mxu0 0.0
  %200 = vmatprep.subr.mxu0 0.0
  %201 = vmatpush1.msra.mxu0 0.0
  %202 = vmatprep.subr.mxu0 0.0
  %203 = vmatpush1.msra.mxu0 0.0
  %204 = vmatprep.subr.mxu0 0.0
  %205 = vmatpush1.msra.mxu0 0.0
  %206 = vmatprep.subr.mxu0 0.0
  %207 = vmatpush1.msra.mxu0 0.0
  %208 = vmatprep.subr.mxu0 0.0
  %209 = vmatpush1.msra.mxu0 0.0
  %210 = vmatprep.subr.mxu0 0.0
  %211 = vmatpush1.msra.mxu0 0.0
  %212 = vmatprep.subr.mxu0 0.0
  %213 = vmatpush1.msra.mxu0 0.0
  %214 = vmatprep.subr.mxu0 0.0
  %215 = vmatpush1.msra.mxu0 0.0
  %216 = vmatprep.subr.mxu0 0.0
  %217 = vmatpush1.msra.mxu0 0.0
  %218 = vmatprep.subr.mxu0 0.0
  %219 = vmatpush1.msra.mxu0 0.0
  %220 = vmatprep.subr.mxu0 0.0
  %221 = vmatpush1.msra.mxu0 0.0
  %222 = vmatprep.subr.mxu0 0.0
  %223 = vmatpush1.msra.mxu0 0.0
  %224 = vmatprep.subr.mxu0 0.0
  %225 = vmatpush1.msra.mxu0 0.0
  %226 = vmatprep.subr.mxu0 0.0
  %227 = vmatpush1.msra.mxu0 0.0
  %228 = vmatprep.mubr.f32.mxu0 0.0
  %229 = vmatmul.mubr.f32.gmra.mrb[0].mxu0 %v156
  %v230 = vpop.f32.mrb[0].mxu0
  %v231 = vadd.f32 0.0, %v230
  %v232 = vpop.f32.mrb[0].mxu0
  %233 = vmatprep.mubr.f32.mxu0 0.0
  %234 = vmatmul.mubr.f32.gmra.mrb[0].mxu0 %v159
  %v235 = vpop.f32.mrb[0].mxu0
  %v236 = vadd.f32 0.0, %v235
  %v237 = vpop.f32.mrb[0].mxu0
  %238 = vdwg.mxu0
  %vm239 = vcmp.gt.f32.partialorder %v231, 0.0
  %vm240 = vcmp.gt.f32.partialorder %v236, 0.0
  %v241 = vmul.f32 %v231, 0.2
  %v242 = vmul.f32 %v236, 0.2
  %v243 = vsel %vm239, %v231, %v241
  %v244 = vsel %vm240, %v236, %v242
  %246 = vset.pattern.permute.xlu0 0
  %247 = vperm.xlu0 %246, %v44
  %v248 = vpop.permute.xlu0 %247
  %251 = vset.pattern.permute.xlu0 0
  %252 = vperm.xlu0 %251, %v45
  %v253 = vpop.permute.xlu0 %252
  %v255 = vmul.f32 %v248, %v243
  %v256 = vmul.f32 %v253, %v244
  %v257 = vpack.c.bf16 %v255, %v255
  %v258 = vpack.c.bf16 %v256, %v256
  %v260 = vsel %vm64, %v257, 0
  %262 = vmatprep.subr.bf16.mxu0 0
  %263 = vmatpush1.bf16.msra.mxu0 %v260
  %264 = vmatprep.subr.bf16.mxu0 0
  %265 = vmatpush1.bf16.msra.mxu0 0
  %266 = vmatprep.subr.bf16.mxu0 0
  %267 = vmatpush1.bf16.msra.mxu0 0
  %268 = vmatprep.subr.bf16.mxu0 0
  %269 = vmatpush1.bf16.msra.mxu0 0
  %270 = vmatprep.subr.bf16.mxu0 0
  %271 = vmatpush1.bf16.msra.mxu0 0
  %272 = vmatprep.subr.bf16.mxu0 0
  %273 = vmatpush1.bf16.msra.mxu0 0
  %274 = vmatprep.subr.bf16.mxu0 0
  %275 = vmatpush1.bf16.msra.mxu0 0
  %276 = vmatprep.subr.bf16.mxu0 0
  %277 = vmatpush1.bf16.msra.mxu0 0
  %278 = vmatprep.subr.bf16.mxu0 0
  %279 = vmatpush1.bf16.msra.mxu0 0
  %280 = vmatprep.subr.bf16.mxu0 0
  %281 = vmatpush1.bf16.msra.mxu0 0
  %282 = vmatprep.subr.bf16.mxu0 0
  %283 = vmatpush1.bf16.msra.mxu0 0
  %284 = vmatprep.subr.bf16.mxu0 0
  %285 = vmatpush1.bf16.msra.mxu0 0
  %286 = vmatprep.subr.bf16.mxu0 0
  %287 = vmatpush1.bf16.msra.mxu0 0
  %288 = vmatprep.subr.bf16.mxu0 0
  %289 = vmatpush1.bf16.msra.mxu0 0
  %290 = vmatprep.subr.bf16.mxu0 0
  %291 = vmatpush1.bf16.msra.mxu0 0
  %292 = vmatprep.subr.bf16.mxu0 0
  %293 = vmatpush1.bf16.msra.mxu0 0
  %294 = vmatprep.mubr.bf16.mxu0 0
  %295 = vmatmul.mubr.bf16.gmra.mrb[0].mxu0 %v62
  %v296 = vpop.f32.mrb[0].mxu0
  %v297 = vadd.f32 %v255, %v296
  %v298 = vpop.f32.mrb[0].mxu0
  %v299 = vpop.f32.mrb[0].mxu0
  %v300 = vpop.f32.mrb[0].mxu0
  %301 = vdwg.mxu0
  %v303 = vsel %vm64, %v258, 0
  %305 = vmatprep.subr.bf16.mxu0 0
  %306 = vmatpush1.bf16.msra.mxu0 %v303
  %307 = vmatprep.subr.bf16.mxu0 0
  %308 = vmatpush1.bf16.msra.mxu0 0
  %309 = vmatprep.subr.bf16.mxu0 0
  %310 = vmatpush1.bf16.msra.mxu0 0
  %311 = vmatprep.subr.bf16.mxu0 0
  %312 = vmatpush1.bf16.msra.mxu0 0
  %313 = vmatprep.subr.bf16.mxu0 0
  %314 = vmatpush1.bf16.msra.mxu0 0
  %315 = vmatprep.subr.bf16.mxu0 0
  %316 = vmatpush1.bf16.msra.mxu0 0
  %317 = vmatprep.subr.bf16.mxu0 0
  %318 = vmatpush1.bf16.msra.mxu0 0
  %319 = vmatprep.subr.bf16.mxu0 0
  %320 = vmatpush1.bf16.msra.mxu0 0
  %321 = vmatprep.subr.bf16.mxu0 0
  %322 = vmatpush1.bf16.msra.mxu0 0
  %323 = vmatprep.subr.bf16.mxu0 0
  %324 = vmatpush1.bf16.msra.mxu0 0
  %325 = vmatprep.subr.bf16.mxu0 0
  %326 = vmatpush1.bf16.msra.mxu0 0
  %327 = vmatprep.subr.bf16.mxu0 0
  %328 = vmatpush1.bf16.msra.mxu0 0
  %329 = vmatprep.subr.bf16.mxu0 0
  %330 = vmatpush1.bf16.msra.mxu0 0
  %331 = vmatprep.subr.bf16.mxu0 0
  %332 = vmatpush1.bf16.msra.mxu0 0
  %333 = vmatprep.subr.bf16.mxu0 0
  %334 = vmatpush1.bf16.msra.mxu0 0
  %335 = vmatprep.subr.bf16.mxu0 0
  %336 = vmatpush1.bf16.msra.mxu0 0
  %337 = vmatprep.mubr.bf16.mxu0 0
  %338 = vmatmul.mubr.bf16.gmra.mrb[0].mxu0 %v109
  %v339 = vpop.f32.mrb[0].mxu0
  %v340 = vadd.f32 %v256, %v339
  %v341 = vpop.f32.mrb[0].mxu0
  %v342 = vpop.f32.mrb[0].mxu0
  %v343 = vpop.f32.mrb[0].mxu0
  %344 = vdwg.mxu0
  %vm345 = vcmask 261120
  %v347 = vsel %vm345, %v297, 0
  %v350 = vsel %vm345, %v340, 0
  %352 = vmatprep.subr.mxu0 0.0
  %353 = vmatpush1.msra.mxu0 %v36
  %354 = vmatprep.subr.mxu0 0.0
  %355 = vmatpush1.msra.mxu0 %v37
  %356 = vmatprep.subr.mxu0 0.0
  %357 = vmatpush1.msra.mxu0 %v38
  %358 = vmatprep.subr.mxu0 0.0
  %359 = vmatpush1.msra.mxu0 %v39
  %360 = vmatprep.subr.mxu0 0.0
  %361 = vmatpush1.msra.mxu0 0.0
  %362 = vmatprep.subr.mxu0 0.0
  %363 = vmatpush1.msra.mxu0 0.0
  %364 = vmatprep.subr.mxu0 0.0
  %365 = vmatpush1.msra.mxu0 0.0
  %366 = vmatprep.subr.mxu0 0.0
  %367 = vmatpush1.msra.mxu0 0.0
  %368 = vmatprep.subr.mxu0 0.0
  %369 = vmatpush1.msra.mxu0 0.0
  %370 = vmatprep.subr.mxu0 0.0
  %371 = vmatpush1.msra.mxu0 0.0
  %372 = vmatprep.subr.mxu0 0.0
  %373 = vmatpush1.msra.mxu0 0.0
  %374 = vmatprep.subr.mxu0 0.0
  %375 = vmatpush1.msra.mxu0 0.0
  %376 = vmatprep.subr.mxu0 0.0
  %377 = vmatpush1.msra.mxu0 0.0
  %378 = vmatprep.subr.mxu0 0.0
  %379 = vmatpush1.msra.mxu0 0.0
  %380 = vmatprep.subr.mxu0 0.0
  %381 = vmatpush1.msra.mxu0 0.0
  %382 = vmatprep.subr.mxu0 0.0
  %383 = vmatpush1.msra.mxu0 0.0
  %384 = vmatprep.subr.mxu0 0.0
  %385 = vmatpush1.msra.mxu0 0.0
  %386 = vmatprep.subr.mxu0 0.0
  %387 = vmatpush1.msra.mxu0 0.0
  %388 = vmatprep.subr.mxu0 0.0
  %389 = vmatpush1.msra.mxu0 0.0
  %390 = vmatprep.subr.mxu0 0.0
  %391 = vmatpush1.msra.mxu0 0.0
  %392 = vmatprep.subr.mxu0 0.0
  %393 = vmatpush1.msra.mxu0 0.0
  %394 = vmatprep.subr.mxu0 0.0
  %395 = vmatpush1.msra.mxu0 0.0
  %396 = vmatprep.subr.mxu0 0.0
  %397 = vmatpush1.msra.mxu0 0.0
  %398 = vmatprep.subr.mxu0 0.0
  %399 = vmatpush1.msra.mxu0 0.0
  %400 = vmatprep.subr.mxu0 0.0
  %401 = vmatpush1.msra.mxu0 0.0
  %402 = vmatprep.subr.mxu0 0.0
  %403 = vmatpush1.msra.mxu0 0.0
  %404 = vmatprep.subr.mxu0 0.0
  %405 = vmatpush1.msra.mxu0 0.0
  %406 = vmatprep.subr.mxu0 0.0
  %407 = vmatpush1.msra.mxu0 0.0
  %408 = vmatprep.subr.mxu0 0.0
  %409 = vmatpush1.msra.mxu0 0.0
  %410 = vmatprep.subr.mxu0 0.0
  %411 = vmatpush1.msra.mxu0 0.0
  %412 = vmatprep.subr.mxu0 0.0
  %413 = vmatpush1.msra.mxu0 0.0
  %414 = vmatprep.subr.mxu0 0.0
  %415 = vmatpush1.msra.mxu0 0.0
  %416 = vmatprep.mubr.f32.mxu0 0.0
  %417 = vmatmul.mubr.f32.gmra.mrb[0].mxu0 %v347
  %v418 = vpop.f32.mrb[0].mxu0
  %v419 = vadd.f32 0.0, %v418
  %v420 = vpop.f32.mrb[0].mxu0
  %421 = vmatprep.mubr.f32.mxu0 0.0
  %422 = vmatmul.mubr.f32.gmra.mrb[0].mxu0 %v350
  %v423 = vpop.f32.mrb[0].mxu0
  %v424 = vadd.f32 0.0, %v423
  %v425 = vpop.f32.mrb[0].mxu0
  %426 = vdwg.mxu0
  %vm427 = vcmp.gt.f32.partialorder %v419, 0.0
  %vm428 = vcmp.gt.f32.partialorder %v424, 0.0
  %v429 = vmul.f32 %v419, 0.2
  %v430 = vmul.f32 %v424, 0.2
  %v431 = vsel %vm427, %v419, %v429
  %v432 = vsel %vm428, %v424, %v430
  %v433 = vmul.f32 %v44, %v33
  %v434 = vmul.f32 %v45, %v34
  %436 = vset.pattern.permute.xlu0 0
  %437 = vperm.xlu0 %436, %v433
  %v438 = vpop.permute.xlu0 %437
  %441 = vset.pattern.permute.xlu0 0
  %442 = vperm.xlu0 %441, %v434
  %v443 = vpop.permute.xlu0 %442
  %v445 = vmul.f32 %v438, %v431
  %v446 = vmul.f32 %v443, %v432
  %v447 = vpack.c.bf16 %v445, %v445
  %v448 = vpack.c.bf16 %v446, %v446
  %v450 = vsel %vm64, %v447, 0
  %452 = vmatprep.subr.bf16.mxu0 0
  %453 = vmatpush1.bf16.msra.mxu0 %v450
  %454 = vmatprep.subr.bf16.mxu0 0
  %455 = vmatpush1.bf16.msra.mxu0 0
  %456 = vmatprep.subr.bf16.mxu0 0
  %457 = vmatpush1.bf16.msra.mxu0 0
  %458 = vmatprep.subr.bf16.mxu0 0
  %459 = vmatpush1.bf16.msra.mxu0 0
  %460 = vmatprep.subr.bf16.mxu0 0
  %461 = vmatpush1.bf16.msra.mxu0 0
  %462 = vmatprep.subr.bf16.mxu0 0
  %463 = vmatpush1.bf16.msra.mxu0 0
  %464 = vmatprep.subr.bf16.mxu0 0
  %465 = vmatpush1.bf16.msra.mxu0 0
  %466 = vmatprep.subr.bf16.mxu0 0
  %467 = vmatpush1.bf16.msra.mxu0 0
  %468 = vmatprep.subr.bf16.mxu0 0
  %469 = vmatpush1.bf16.msra.mxu0 0
  %470 = vmatprep.subr.bf16.mxu0 0
  %471 = vmatpush1.bf16.msra.mxu0 0
  %472 = vmatprep.subr.bf16.mxu0 0
  %473 = vmatpush1.bf16.msra.mxu0 0
  %474 = vmatprep.subr.bf16.mxu0 0
  %475 = vmatpush1.bf16.msra.mxu0 0
  %476 = vmatprep.subr.bf16.mxu0 0
  %477 = vmatpush1.bf16.msra.mxu0 0
  %478 = vmatprep.subr.bf16.mxu0 0
  %479 = vmatpush1.bf16.msra.mxu0 0
  %480 = vmatprep.subr.bf16.mxu0 0
  %481 = vmatpush1.bf16.msra.mxu0 0
  %482 = vmatprep.subr.bf16.mxu0 0
  %483 = vmatpush1.bf16.msra.mxu0 0
  %484 = vmatprep.mubr.bf16.mxu0 0
  %485 = vmatmul.mubr.bf16.gmra.mrb[0].mxu0 %v62
  %v486 = vpop.f32.mrb[0].mxu0
  %v487 = vadd.f32 %v445, %v486
  %v488 = vpop.f32.mrb[0].mxu0
  %v489 = vpop.f32.mrb[0].mxu0
  %v490 = vpop.f32.mrb[0].mxu0
  %491 = vdwg.mxu0
  %v493 = vsel %vm64, %v448, 0
  %495 = vmatprep.subr.bf16.mxu0 0
  %496 = vmatpush1.bf16.msra.mxu0 %v493
  %497 = vmatprep.subr.bf16.mxu0 0
  %498 = vmatpush1.bf16.msra.mxu0 0
  %499 = vmatprep.subr.bf16.mxu0 0
  %500 = vmatpush1.bf16.msra.mxu0 0
  %501 = vmatprep.subr.bf16.mxu0 0
  %502 = vmatpush1.bf16.msra.mxu0 0
  %503 = vmatprep.subr.bf16.mxu0 0
  %504 = vmatpush1.bf16.msra.mxu0 0
  %505 = vmatprep.subr.bf16.mxu0 0
  %506 = vmatpush1.bf16.msra.mxu0 0
  %507 = vmatprep.subr.bf16.mxu0 0
  %508 = vmatpush1.bf16.msra.mxu0 0
  %509 = vmatprep.subr.bf16.mxu0 0
  %510 = vmatpush1.bf16.msra.mxu0 0
  %511 = vmatprep.subr.bf16.mxu0 0
  %512 = vmatpush1.bf16.msra.mxu0 0
  %513 = vmatprep.subr.bf16.mxu0 0
  %514 = vmatpush1.bf16.msra.mxu0 0
  %515 = vmatprep.subr.bf16.mxu0 0
  %516 = vmatpush1.bf16.msra.mxu0 0
  %517 = vmatprep.subr.bf16.mxu0 0
  %518 = vmatpush1.bf16.msra.mxu0 0
  %519 = vmatprep.subr.bf16.mxu0 0
  %520 = vmatpush1.bf16.msra.mxu0 0
  %521 = vmatprep.subr.bf16.mxu0 0
  %522 = vmatpush1.bf16.msra.mxu0 0
  %523 = vmatprep.subr.bf16.mxu0 0
  %524 = vmatpush1.bf16.msra.mxu0 0
  %525 = vmatprep.subr.bf16.mxu0 0
  %526 = vmatpush1.bf16.msra.mxu0 0
  %527 = vmatprep.mubr.bf16.mxu0 0
  %528 = vmatmul.mubr.bf16.gmra.mrb[0].mxu0 %v109
  %v529 = vpop.f32.mrb[0].mxu0
  %v530 = vadd.f32 %v446, %v529
  %v531 = vpop.f32.mrb[0].mxu0
  %v532 = vpop.f32.mrb[0].mxu0
  %v533 = vpop.f32.mrb[0].mxu0
  %534 = vdwg.mxu0
  %v536 = vsel %vm345, %v487, 0
  %v539 = vsel %vm345, %v530, 0
  %541 = vmatprep.subr.mxu0 0.0
  %542 = vmatpush1.msra.mxu0 %v40
  %543 = vmatprep.subr.mxu0 0.0
  %544 = vmatpush1.msra.mxu0 %v41
  %545 = vmatprep.subr.mxu0 0.0
  %546 = vmatpush1.msra.mxu0 %v42
  %547 = vmatprep.subr.mxu0 0.0
  %548 = vmatpush1.msra.mxu0 %v43
  %549 = vmatprep.subr.mxu0 0.0
  %550 = vmatpush1.msra.mxu0 0.0
  %551 = vmatprep.subr.mxu0 0.0
  %552 = vmatpush1.msra.mxu0 0.0
  %553 = vmatprep.subr.mxu0 0.0
  %554 = vmatpush1.msra.mxu0 0.0
  %555 = vmatprep.subr.mxu0 0.0
  %556 = vmatpush1.msra.mxu0 0.0
  %557 = vmatprep.subr.mxu0 0.0
  %558 = vmatpush1.msra.mxu0 0.0
  %559 = vmatprep.subr.mxu0 0.0
  %560 = vmatpush1.msra.mxu0 0.0
  %561 = vmatprep.subr.mxu0 0.0
  %562 = vmatpush1.msra.mxu0 0.0
  %563 = vmatprep.subr.mxu0 0.0
  %564 = vmatpush1.msra.mxu0 0.0
  %565 = vmatprep.subr.mxu0 0.0
  %566 = vmatpush1.msra.mxu0 0.0
  %567 = vmatprep.subr.mxu0 0.0
  %568 = vmatpush1.msra.mxu0 0.0
  %569 = vmatprep.subr.mxu0 0.0
  %570 = vmatpush1.msra.mxu0 0.0
  %571 = vmatprep.subr.mxu0 0.0
  %572 = vmatpush1.msra.mxu0 0.0
  %573 = vmatprep.subr.mxu0 0.0
  %574 = vmatpush1.msra.mxu0 0.0
  %575 = vmatprep.subr.mxu0 0.0
  %576 = vmatpush1.msra.mxu0 0.0
  %577 = vmatprep.subr.mxu0 0.0
  %578 = vmatpush1.msra.mxu0 0.0
  %579 = vmatprep.subr.mxu0 0.0
  %580 = vmatpush1.msra.mxu0 0.0
  %581 = vmatprep.subr.mxu0 0.0
  %582 = vmatpush1.msra.mxu0 0.0
  %583 = vmatprep.subr.mxu0 0.0
  %584 = vmatpush1.msra.mxu0 0.0
  %585 = vmatprep.subr.mxu0 0.0
  %586 = vmatpush1.msra.mxu0 0.0
  %587 = vmatprep.subr.mxu0 0.0
  %588 = vmatpush1.msra.mxu0 0.0
  %589 = vmatprep.subr.mxu0 0.0
  %590 = vmatpush1.msra.mxu0 0.0
  %591 = vmatprep.subr.mxu0 0.0
  %592 = vmatpush1.msra.mxu0 0.0
  %593 = vmatprep.subr.mxu0 0.0
  %594 = vmatpush1.msra.mxu0 0.0
  %595 = vmatprep.subr.mxu0 0.0
  %596 = vmatpush1.msra.mxu0 0.0
  %597 = vmatprep.subr.mxu0 0.0
  %598 = vmatpush1.msra.mxu0 0.0
  %599 = vmatprep.subr.mxu0 0.0
  %600 = vmatpush1.msra.mxu0 0.0
  %601 = vmatprep.subr.mxu0 0.0
  %602 = vmatpush1.msra.mxu0 0.0
  %603 = vmatprep.subr.mxu0 0.0
  %604 = vmatpush1.msra.mxu0 0.0
  %605 = vmatprep.mubr.f32.mxu0 0.0
  %606 = vmatmul.mubr.f32.gmra.mrb[0].mxu0 %v536
  %v607 = vpop.f32.mrb[0].mxu0
  %v608 = vadd.f32 0.0, %v607
  %v609 = vpop.f32.mrb[0].mxu0
  %610 = vmatprep.mubr.f32.mxu0 0.0
  %611 = vmatmul.mubr.f32.gmra.mrb[0].mxu0 %v539
  %v612 = vpop.f32.mrb[0].mxu0
  %v613 = vadd.f32 0.0, %v612
  %v614 = vpop.f32.mrb[0].mxu0
  %615 = vdwg.mxu0
  %v616 = vmul.f32 %v49, %v608
  %v617 = vmul.f32 %v54, %v613
  %618 = vst.msk [vmem:[%s7] sm:$0xff] %vm154, %v616
  %619 = vst.msk [vmem:[%s7 + $0x8] sm:$0xff] %vm154, %v617
  // Predicated region
  $region30: #{tpu_custom_call.1} parent=0 // pred_check
    _
  $region31: #{tpu_custom_call.1} parent=0 // pred_check_branch
    %621 = sbr.rel (0) target = $region33
  $region32: #{tpu_custom_call.1} parent=0 // pred_region
    _
  $region33: #{tpu_custom_call.1} parent=0 // pred_fallthru
    _
  // Predicated region
  $region34: #{tpu_custom_call.1} parent=0 // pred_check
    _
  $region35: #{tpu_custom_call.1} parent=0 // pred_check_branch
    %623 = sbr.rel (0) target = $region37
  $region36: #{tpu_custom_call.1} parent=0 // pred_region
    _
  $region37: #{tpu_custom_call.1} parent=0 // pred_fallthru
    _

</llo_original>
